<compile_context>
chip_gen: v7x
topology: tpu7x:2x2x1
jax: 0.10.0
libtpu: 0.0.40
codegen_flags: <defaults>
</compile_context>

<pallas_src>
import functools
import math

import jax
import jax.numpy as jnp
from jax.experimental import pallas as pl
from jax.experimental.pallas import tpu as pltpu

E_K = 4  # top-k experts per token (e_k in the reference)


def _round_up(a, b):
    return (a + b - 1) // b * b


def _router_kernel(x_ref, w_ref, b_ref, mask_ref, wts_ref, *, k, num_classes,
                   gate_sizes):
    """Fused multi-gate router for one token tile (tokens on the lane dim).

    x_ref:    (TM, H)                            tokens, native dtype
    w_ref:    (E_total, H)                       all gate weights (PyTorch (out,in) layout)
    b_ref:    (E_total, 1) f32                   all gate biases
    mask_ref: (G, num_classes, k, TM) int8       one-hot masks in final layout
    wts_ref:  (G, k, TM)  x.dtype                renormalized routing weights (transposed)
    """
    tm = x_ref.shape[0]

    # One MXU matmul for every gate.  "NT" contraction (both operands contract
    # on their last dim) is MXU-native (same pattern as q·kᵀ in flash
    # attention) and directly yields the token-lane-dense (E_total, TM) layout
    # — no transpose of the big x tile, no f32 pre-cast of it either.
    logits = jax.lax.dot_general(
        w_ref[...], x_ref[...],
        dimension_numbers=(((1,), (1,)), ((), ())),
        preferred_element_type=jnp.float32,
    )
    logits = logits + b_ref[...]                       # (E_total, TM) f32

    kk_iota = jax.lax.broadcasted_iota(jnp.int32, (k, tm), 0)

    off = 0
    for g, e_g in enumerate(gate_sizes):
        lg = logits[off:off + e_g, :]                  # (e_g, TM) static slice
        off += e_g

        # softmax over experts (sublane axis) in f32; the approx reciprocal
        # runs on the otherwise-idle EUP slot and its uniform per-token scale
        # cancels exactly in the renormalization below.
        m = jnp.max(lg, axis=0, keepdims=True)
        ex = jnp.exp(lg - m)
        probs = ex * pl.reciprocal(jnp.sum(ex, axis=0, keepdims=True), approx=True)

        e_iota = jax.lax.broadcasted_iota(jnp.int32, (e_g, tm), 0)

        # Iterative top-k (k small & static): max + lowest-index argmax (same
        # tie-break as lax.top_k) + mask-out.  Live state is only (k, TM).
        work = probs
        topv = jnp.zeros((k, tm), jnp.float32)
        sel = jnp.zeros((k, tm), jnp.int32)
        for j in range(k):
            vmax = jnp.max(work, axis=0, keepdims=True)                     # (1,TM)
            amax = jnp.min(jnp.where(work >= vmax, e_iota, e_g), axis=0,
                           keepdims=True)                                   # (1,TM)
            topv = jnp.where(kk_iota == j, vmax, topv)
            sel = jnp.where(kk_iota == j, amax, sel)
            work = jnp.where(e_iota == amax, -jnp.inf, work)

        # routing_weights /= routing_weights.sum(-1, keepdim=True)
        inv = pl.reciprocal(jnp.sum(topv, axis=0, keepdims=True))           # exact
        wts_ref[g] = (topv * inv).astype(wts_ref.dtype)

        # one_hot(selected_experts, num_classes) directly in the final
        # (num_classes, k, T) layout: one broadcast compare, lane-dense store.
        cls = jax.lax.broadcasted_iota(jnp.int32, (num_classes, k, tm), 0)
        mask_ref[g] = (cls == sel[None, :, :]).astype(mask_ref.dtype)


def fuse_gate_params(params, compute_dtype=jnp.float32):
    """Hoisted out of the forward path: fuse all gate weights/biases ONCE.

    params: list of (w, b) with w in PyTorch layout (export_num_g, hidden) and
    b of shape (export_num_g,).  Returns (w_cat, b_cat, gate_sizes).
    """
    gate_sizes = tuple(int(w.shape[0]) for w, _ in params)
    w_cat = jnp.concatenate([w for w, _ in params], axis=0).astype(compute_dtype)
    b_cat = jnp.concatenate([jnp.reshape(b, (-1,)) for _, b in params], axis=0)
    b_cat = jnp.reshape(b_cat, (-1, 1)).astype(jnp.float32)
    return w_cat, b_cat, gate_sizes


def route_only_forward(x, fused, export_num1, *, tm=512, mask_dtype=jnp.int8,
                       compute_dtype=None):
    """Mirrors route_only.forward. Returns (mask1, mask2, mask3, w1, w2, w3).

    fused = fuse_gate_params(params, ...) (precomputed once).
    Masks are int8 (PyTorch one_hot is int64) with num_classes = export_num1.
    Optionally cast activations/weights to compute_dtype (e.g. bf16) to halve
    the dominant HBM read; note bf16 logits can flip top-k on near-ties vs a
    pure-f32 reference, so it is off by default.
    """
    w_cat, b_cat, gate_sizes = fused
    bsz, seq_len, dim = x.shape
    t = bsz * seq_len
    x2d = x.reshape(t, dim)
    if compute_dtype is not None:
        x2d = x2d.astype(compute_dtype)
        w_cat = w_cat.astype(compute_dtype)

    n_gates = len(gate_sizes)
    e_total = int(w_cat.shape[0])
    k = E_K

    if max(gate_sizes) > export_num1:
        # F.one_hot would raise for an expert index >= num_classes.
        raise ValueError("all gate sizes must be <= export_num1 (one_hot num_classes)")
    if min(gate_sizes) < k:
        raise ValueError("every gate must have at least e_k experts")

    # Token tile: full extent for small T; otherwise a lane-aligned tile chosen
    # so the grid has >= 2 steps (v7x has 2 TensorCores) and, for large T, the
    # requested tm.  No wrapper pad: Pallas clips the partial final block.
    if t <= 128:
        tm_eff = t
    else:
        assert tm % 128 == 0, "token tile must be a multiple of 128 when tiling"
        tm_eff = min(tm, _round_up(-(-t // 2), 128))
    grid = (pl.cdiv(t, tm_eff),)

    # Scoped-VMEM budget from the actual footprint (double buffers + f32
    # working set), capped below v7x's 64 MiB physical VMEM.
    xb = jnp.dtype(x2d.dtype).itemsize
    mb = jnp.dtype(mask_dtype).itemsize
    k_pad = _round_up(k, 8)  # sublane padding of the k axis in VMEM
    est = (2 * tm_eff * dim * xb                                   # x double buffer
           + 2 * e_total * dim * xb + 2 * e_total * 128 * 4        # weights + bias
           + 2 * n_gates * export_num1 * k_pad * tm_eff * mb       # mask out buffers
           + 2 * n_gates * k_pad * tm_eff * xb                     # weights out buffers
           + 4 * e_total * max(tm_eff, 128) * 4)                   # logits/top-k f32 work
    vmem_limit = int(min(max(2 * est + (4 << 20), 32 << 20), 56 << 20))

    kernel = functools.partial(
        _router_kernel, k=k, num_classes=export_num1, gate_sizes=gate_sizes)

    # NOTE: w_cat/b_cat block indices are grid-invariant, so they are fetched
    # from HBM once and kept resident; the token axis is the only pipelined dim.
    mask_all, wts_all = pl.pallas_call(
        kernel,
        out_shape=(
            jax.ShapeDtypeStruct((n_gates, export_num1, k, t), mask_dtype),
            jax.ShapeDtypeStruct((n_gates, k, t), x.dtype),
        ),
        grid=grid,
        in_specs=[
            pl.BlockSpec((tm_eff, dim), lambda i: (i, 0)),
            pl.BlockSpec((e_total, dim), lambda i: (0, 0)),
            pl.BlockSpec((e_total, 1), lambda i: (0, 0)),
        ],
        out_specs=(
            pl.BlockSpec((n_gates, export_num1, k, tm_eff), lambda i: (0, 0, 0, i)),
            pl.BlockSpec((n_gates, k, tm_eff), lambda i: (0, 0, i)),
        ),
        compiler_params=pltpu.CompilerParams(
            dimension_semantics=("parallel",),
            vmem_limit_bytes=vmem_limit),
    )(x2d, w_cat, b_cat)

    # Leading-dim slices only (no pass over the big mask tensor); the weights
    # transpose is tiny ((k, T) -> (T, k)).
    masks = tuple(mask_all[g] for g in range(n_gates))            # (E1, k, T)
    wts = tuple(wts_all[g].T for g in range(n_gates))             # (T, k)
    return masks + wts  # (m1, m2, m3, w1, w2, w3)


def init_params(key, hidden_size, export_nums):
    """Deterministic nn.Linear-style init: U(-1/sqrt(H), 1/sqrt(H)), PyTorch layout."""
    params = []
    bound = 1.0 / math.sqrt(hidden_size)
    for e in export_nums:
        key, kw, kb = jax.random.split(key, 3)
        w = jax.random.uniform(kw, (e, hidden_size), jnp.float32, -bound, bound)
        b = jax.random.uniform(kb, (e,), jnp.float32, -bound, bound)
        params.append((w, b))
    return params


def _ref_forward(x, params, export_num1, mask_dtype=jnp.int8):
    """Pure-JAX reference mirroring the PyTorch module."""
    x2d = x.reshape(-1, x.shape[-1])
    masks, wts = [], []
    for w, b in params:
        logits = x2d.astype(jnp.float32) @ w.astype(jnp.float32).T + b[None, :]
        probs = jax.nn.softmax(logits, axis=-1)
        vals, idx = jax.lax.top_k(probs, E_K)
        vals = vals / vals.sum(-1, keepdims=True)
        mask = jax.nn.one_hot(idx, export_num1, dtype=mask_dtype)     # (T, k, E1)
        masks.append(jnp.transpose(mask, (2, 1, 0)))
        wts.append(vals.astype(x.dtype))
    return tuple(masks) + tuple(wts)


if __name__ == "__main__":
    hidden_size = 32
    export_num1, export_num2, export_num3 = 8, 8, 8
    export_nums = (export_num1, export_num2, export_num3)

    key = jax.random.PRNGKey(0)
    kx, kp, kx2 = jax.random.split(key, 3)

    params = init_params(kp, hidden_size, export_nums)
    fused = fuse_gate_params(params, jnp.float32)   # hoisted: done once at init

    # --- Case A: tiny batch, single full-extent token block -----------------
    bsz, seq_len = 2, 8
    x = jax.random.normal(kx, (bsz, seq_len, hidden_size), jnp.float32)
    outs = jax.block_until_ready(route_only_forward(x, fused, export_num1))
    m1, m2, m3, w1, w2, w3 = outs

    t = bsz * seq_len
    assert m1.shape == (export_num1, E_K, t) and m1.dtype == jnp.int8
    assert w1.shape == (t, E_K) and w1.dtype == x.dtype
    # each token picked exactly e_k experts and weights renormalize to 1
    assert int(m1.astype(jnp.int32).sum()) == t * E_K
    assert bool(jnp.allclose(w1.sum(axis=-1), 1.0, atol=1e-5))

    ref = _ref_forward(x, params, export_num1)
    for got_m, ref_m in zip((m1, m2, m3), ref[:3]):
        assert bool(jnp.array_equal(got_m, ref_m))
    for got_w, ref_w in zip((w1, w2, w3), ref[3:]):
        assert bool(jnp.allclose(got_w, ref_w, atol=1e-5, rtol=1e-5))

    # --- Case B: multi-step grid with a PARTIAL final block (no wrapper pad).
    # Inputs are quantized (x to 1/4 steps, weights/biases to 1/64 steps) so
    # the H=32 f32 matmul is exact under any MXU precision mode and the mask
    # comparison vs the reference is deterministic.
    bsz_b, seq_b = 2, 75                                  # t = 150 -> 128 + 22
    xb = jnp.round(jax.random.normal(kx2, (bsz_b, seq_b, hidden_size),
                                     jnp.float32) * 4.0) / 4.0
    params_q = [(jnp.round(w * 64.0) / 64.0, jnp.round(b * 64.0) / 64.0)
                for w, b in params]
    fused_q = fuse_gate_params(params_q, jnp.float32)
    outs_b = jax.block_until_ready(route_only_forward(xb, fused_q, export_num1))

    tb = bsz_b * seq_b
    ref_b = _ref_forward(xb, params_q, export_num1)
    for got_m, ref_m in zip(outs_b[:3], ref_b[:3]):
        assert got_m.shape == (export_num1, E_K, tb) and got_m.dtype == jnp.int8
        assert int(got_m.astype(jnp.int32).sum()) == tb * E_K
        assert bool(jnp.array_equal(got_m, ref_m))
    for got_w, ref_w in zip(outs_b[3:], ref_b[3:]):
        assert bool(jnp.allclose(got_w.sum(axis=-1), 1.0, atol=1e-5))
        assert bool(jnp.allclose(got_w, ref_w, atol=1e-5, rtol=1e-5))

    print("KERNEL_OK")
</pallas_src>

<mosaic_0001>
module attributes {stable_mosaic.version = 11 : i64} {
  func.func @_router_kernel(%arg0: i32, %arg1: memref<16x32xf32, #tpu.memory_space<vmem>>, %arg2: memref<24x32xf32, #tpu.memory_space<vmem>>, %arg3: memref<24x1xf32, #tpu.memory_space<vmem>>, %arg4: memref<3x8x4x16xi8, #tpu.memory_space<vmem>>, %arg5: memref<3x4x16xf32, #tpu.memory_space<vmem>>) attributes {dimension_semantics = [#tpu.dimension_semantics<parallel>], iteration_bounds = array<i64: 1>, scalar_prefetch = 0 : i64, scratch_operands = 0 : i64, tpu.core_type = #tpu.core_type<tc>, window_params = [{transform_indices = @transform_0, window_bounds = array<i64: 16, 32>}, {pipeline_mode = #tpu.pipeline_mode<synchronous>, transform_indices = @transform_1, window_bounds = array<i64: 24, 32>}, {pipeline_mode = #tpu.pipeline_mode<synchronous>, transform_indices = @transform_2, window_bounds = array<i64: 24, 1>}, {transform_indices = @transform_3, window_bounds = array<i64: 3, 8, 4, 16>}, {transform_indices = @transform_4, window_bounds = array<i64: 3, 4, 16>}]} {
    %c0 = arith.constant 0 : index
    %c0_0 = arith.constant 0 : index
    %0 = vector.load %arg2[%c0, %c0_0] : memref<24x32xf32, #tpu.memory_space<vmem>>, vector<24x32xf32>
    %c0_1 = arith.constant 0 : index
    %c0_2 = arith.constant 0 : index
    %1 = vector.load %arg1[%c0_1, %c0_2] : memref<16x32xf32, #tpu.memory_space<vmem>>, vector<16x32xf32>
    %cst = arith.constant dense<0.000000e+00> : vector<24x16xf32>
    %2 = tpu.matmul %0, %1, %cst {dimension_numbers = #tpu.dot_dimension_numbers<[1], [1], [0], [0], [0, 0, 1, 0], [], []>} : vector<24x32xf32>, vector<16x32xf32>, vector<24x16xf32> -> vector<24x16xf32>
    %c0_3 = arith.constant 0 : index
    %c0_4 = arith.constant 0 : index
    %3 = vector.load %arg3[%c0_3, %c0_4] : memref<24x1xf32, #tpu.memory_space<vmem>>, vector<24x1xf32>
    %4 = vector.broadcast %3 : vector<24x1xf32> to vector<24x16xf32>
    %5 = arith.addf %2, %4 : vector<24x16xf32>
    %6 = tpu.iota {dimensions = array<i32: 0>} : vector<4x16xi32>
    %7 = vector.extract_strided_slice %5 {offsets = [0, 0], sizes = [8, 16], strides = [1, 1]} : vector<24x16xf32> to vector<8x16xf32>
    %cst_5 = arith.constant dense<0xFF800000> : vector<16xf32>
    %8 = vector.multi_reduction <maximumf>, %7, %cst_5 [0] : vector<8x16xf32> to vector<16xf32>
    %9 = vector.shape_cast %8 : vector<16xf32> to vector<1x16xf32>
    %10 = vector.broadcast %9 : vector<1x16xf32> to vector<8x16xf32>
    %11 = arith.subf %7, %10 : vector<8x16xf32>
    %12 = math.exp %11 : vector<8x16xf32>
    %cst_6 = arith.constant dense<0.000000e+00> : vector<16xf32>
    %13 = vector.multi_reduction <add>, %12, %cst_6 [0] : vector<8x16xf32> to vector<16xf32>
    %14 = vector.shape_cast %13 : vector<16xf32> to vector<1x16xf32>
    %15 = tpu.reciprocal %14 {approx = true} : vector<1x16xf32> -> vector<1x16xf32>
    %16 = vector.broadcast %15 : vector<1x16xf32> to vector<8x16xf32>
    %17 = arith.mulf %12, %16 : vector<8x16xf32>
    %18 = tpu.iota {dimensions = array<i32: 0>} : vector<8x16xi32>
    %cst_7 = arith.constant 0.000000e+00 : f32
    %19 = vector.broadcast %cst_7 : f32 to vector<4x16xf32>
    %c0_i32 = arith.constant 0 : i32
    %20 = vector.broadcast %c0_i32 : i32 to vector<4x16xi32>
    %cst_8 = arith.constant dense<0xFF800000> : vector<16xf32>
    %21 = vector.multi_reduction <maximumf>, %17, %cst_8 [0] : vector<8x16xf32> to vector<16xf32>
    %22 = vector.shape_cast %21 : vector<16xf32> to vector<1x16xf32>
    %23 = vector.broadcast %22 : vector<1x16xf32> to vector<8x16xf32>
    %24 = arith.cmpf oge, %17, %23 : vector<8x16xf32>
    %c8_i32 = arith.constant 8 : i32
    %25 = vector.broadcast %c8_i32 : i32 to vector<8x16xi32>
    %26 = arith.select %24, %18, %25 : vector<8x16xi1>, vector<8x16xi32>
    %cst_9 = arith.constant dense<2147483647> : vector<16xi32>
    %27 = vector.multi_reduction <minsi>, %26, %cst_9 [0] : vector<8x16xi32> to vector<16xi32>
    %28 = vector.shape_cast %27 : vector<16xi32> to vector<1x16xi32>
    %c0_i32_10 = arith.constant 0 : i32
    %29 = vector.broadcast %c0_i32_10 : i32 to vector<4x16xi32>
    %30 = arith.cmpi eq, %6, %29 : vector<4x16xi32>
    %31 = vector.shape_cast %22 : vector<1x16xf32> to vector<1x16xf32>
    %32 = vector.broadcast %31 : vector<1x16xf32> to vector<4x16xf32>
    %33 = arith.select %30, %32, %19 : vector<4x16xi1>, vector<4x16xf32>
    %c0_i32_11 = arith.constant 0 : i32
    %34 = vector.broadcast %c0_i32_11 : i32 to vector<4x16xi32>
    %35 = arith.cmpi eq, %6, %34 : vector<4x16xi32>
    %36 = vector.shape_cast %28 : vector<1x16xi32> to vector<1x16xi32>
    %37 = vector.broadcast %36 : vector<1x16xi32> to vector<4x16xi32>
    %38 = arith.select %35, %37, %20 : vector<4x16xi1>, vector<4x16xi32>
    %39 = vector.broadcast %28 : vector<1x16xi32> to vector<8x16xi32>
    %40 = arith.cmpi eq, %18, %39 : vector<8x16xi32>
    %cst_12 = arith.constant 0xFF800000 : f32
    %41 = vector.broadcast %cst_12 : f32 to vector<8x16xf32>
    %42 = arith.select %40, %41, %17 : vector<8x16xi1>, vector<8x16xf32>
    %cst_13 = arith.constant dense<0xFF800000> : vector<16xf32>
    %43 = vector.multi_reduction <maximumf>, %42, %cst_13 [0] : vector<8x16xf32> to vector<16xf32>
    %44 = vector.shape_cast %43 : vector<16xf32> to vector<1x16xf32>
    %45 = vector.broadcast %44 : vector<1x16xf32> to vector<8x16xf32>
    %46 = arith.cmpf oge, %42, %45 : vector<8x16xf32>
    %c8_i32_14 = arith.constant 8 : i32
    %47 = vector.broadcast %c8_i32_14 : i32 to vector<8x16xi32>
    %48 = arith.select %46, %18, %47 : vector<8x16xi1>, vector<8x16xi32>
    %cst_15 = arith.constant dense<2147483647> : vector<16xi32>
    %49 = vector.multi_reduction <minsi>, %48, %cst_15 [0] : vector<8x16xi32> to vector<16xi32>
    %50 = vector.shape_cast %49 : vector<16xi32> to vector<1x16xi32>
    %c1_i32 = arith.constant 1 : i32
    %51 = vector.broadcast %c1_i32 : i32 to vector<4x16xi32>
    %52 = arith.cmpi eq, %6, %51 : vector<4x16xi32>
    %53 = vector.shape_cast %44 : vector<1x16xf32> to vector<1x16xf32>
    %54 = vector.broadcast %53 : vector<1x16xf32> to vector<4x16xf32>
    %55 = arith.select %52, %54, %33 : vector<4x16xi1>, vector<4x16xf32>
    %c1_i32_16 = arith.constant 1 : i32
    %56 = vector.broadcast %c1_i32_16 : i32 to vector<4x16xi32>
    %57 = arith.cmpi eq, %6, %56 : vector<4x16xi32>
    %58 = vector.shape_cast %50 : vector<1x16xi32> to vector<1x16xi32>
    %59 = vector.broadcast %58 : vector<1x16xi32> to vector<4x16xi32>
    %60 = arith.select %57, %59, %38 : vector<4x16xi1>, vector<4x16xi32>
    %61 = vector.broadcast %50 : vector<1x16xi32> to vector<8x16xi32>
    %62 = arith.cmpi eq, %18, %61 : vector<8x16xi32>
    %cst_17 = arith.constant 0xFF800000 : f32
    %63 = vector.broadcast %cst_17 : f32 to vector<8x16xf32>
    %64 = arith.select %62, %63, %42 : vector<8x16xi1>, vector<8x16xf32>
    %cst_18 = arith.constant dense<0xFF800000> : vector<16xf32>
    %65 = vector.multi_reduction <maximumf>, %64, %cst_18 [0] : vector<8x16xf32> to vector<16xf32>
    %66 = vector.shape_cast %65 : vector<16xf32> to vector<1x16xf32>
    %67 = vector.broadcast %66 : vector<1x16xf32> to vector<8x16xf32>
    %68 = arith.cmpf oge, %64, %67 : vector<8x16xf32>
    %c8_i32_19 = arith.constant 8 : i32
    %69 = vector.broadcast %c8_i32_19 : i32 to vector<8x16xi32>
    %70 = arith.select %68, %18, %69 : vector<8x16xi1>, vector<8x16xi32>
    %cst_20 = arith.constant dense<2147483647> : vector<16xi32>
    %71 = vector.multi_reduction <minsi>, %70, %cst_20 [0] : vector<8x16xi32> to vector<16xi32>
    %72 = vector.shape_cast %71 : vector<16xi32> to vector<1x16xi32>
    %c2_i32 = arith.constant 2 : i32
    %73 = vector.broadcast %c2_i32 : i32 to vector<4x16xi32>
    %74 = arith.cmpi eq, %6, %73 : vector<4x16xi32>
    %75 = vector.shape_cast %66 : vector<1x16xf32> to vector<1x16xf32>
    %76 = vector.broadcast %75 : vector<1x16xf32> to vector<4x16xf32>
    %77 = arith.select %74, %76, %55 : vector<4x16xi1>, vector<4x16xf32>
    %c2_i32_21 = arith.constant 2 : i32
    %78 = vector.broadcast %c2_i32_21 : i32 to vector<4x16xi32>
    %79 = arith.cmpi eq, %6, %78 : vector<4x16xi32>
    %80 = vector.shape_cast %72 : vector<1x16xi32> to vector<1x16xi32>
    %81 = vector.broadcast %80 : vector<1x16xi32> to vector<4x16xi32>
    %82 = arith.select %79, %81, %60 : vector<4x16xi1>, vector<4x16xi32>
    %83 = vector.broadcast %72 : vector<1x16xi32> to vector<8x16xi32>
    %84 = arith.cmpi eq, %18, %83 : vector<8x16xi32>
    %cst_22 = arith.constant 0xFF800000 : f32
    %85 = vector.broadcast %cst_22 : f32 to vector<8x16xf32>
    %86 = arith.select %84, %85, %64 : vector<8x16xi1>, vector<8x16xf32>
    %cst_23 = arith.constant dense<0xFF800000> : vector<16xf32>
    %87 = vector.multi_reduction <maximumf>, %86, %cst_23 [0] : vector<8x16xf32> to vector<16xf32>
    %88 = vector.shape_cast %87 : vector<16xf32> to vector<1x16xf32>
    %89 = vector.broadcast %88 : vector<1x16xf32> to vector<8x16xf32>
    %90 = arith.cmpf oge, %86, %89 : vector<8x16xf32>
    %c8_i32_24 = arith.constant 8 : i32
    %91 = vector.broadcast %c8_i32_24 : i32 to vector<8x16xi32>
    %92 = arith.select %90, %18, %91 : vector<8x16xi1>, vector<8x16xi32>
    %cst_25 = arith.constant dense<2147483647> : vector<16xi32>
    %93 = vector.multi_reduction <minsi>, %92, %cst_25 [0] : vector<8x16xi32> to vector<16xi32>
    %94 = vector.shape_cast %93 : vector<16xi32> to vector<1x16xi32>
    %c3_i32 = arith.constant 3 : i32
    %95 = vector.broadcast %c3_i32 : i32 to vector<4x16xi32>
    %96 = arith.cmpi eq, %6, %95 : vector<4x16xi32>
    %97 = vector.shape_cast %88 : vector<1x16xf32> to vector<1x16xf32>
    %98 = vector.broadcast %97 : vector<1x16xf32> to vector<4x16xf32>
    %99 = arith.select %96, %98, %77 : vector<4x16xi1>, vector<4x16xf32>
    %c3_i32_26 = arith.constant 3 : i32
    %100 = vector.broadcast %c3_i32_26 : i32 to vector<4x16xi32>
    %101 = arith.cmpi eq, %6, %100 : vector<4x16xi32>
    %102 = vector.shape_cast %94 : vector<1x16xi32> to vector<1x16xi32>
    %103 = vector.broadcast %102 : vector<1x16xi32> to vector<4x16xi32>
    %104 = arith.select %101, %103, %82 : vector<4x16xi1>, vector<4x16xi32>
    %cst_27 = arith.constant dense<0.000000e+00> : vector<16xf32>
    %105 = vector.multi_reduction <add>, %99, %cst_27 [0] : vector<4x16xf32> to vector<16xf32>
    %106 = vector.shape_cast %105 : vector<16xf32> to vector<1x16xf32>
    %107 = tpu.reciprocal %106 : vector<1x16xf32> -> vector<1x16xf32>
    %108 = vector.broadcast %107 : vector<1x16xf32> to vector<4x16xf32>
    %109 = arith.mulf %99, %108 : vector<4x16xf32>
    %c0_28 = arith.constant 0 : index
    %c0_29 = arith.constant 0 : index
    %c0_30 = arith.constant 0 : index
    %110 = vector.load %arg5[%c0_28, %c0_29, %c0_30] : memref<3x4x16xf32, #tpu.memory_space<vmem>>, vector<1x4x16xf32>
    %111 = vector.shape_cast %110 : vector<1x4x16xf32> to vector<4x16xf32>
    %112 = vector.shape_cast %109 : vector<4x16xf32> to vector<1x4x16xf32>
    tpu.vector_store %arg5[%c0_28, %c0_29, %c0_30], %112 {strides = array<i32>} : memref<3x4x16xf32, #tpu.memory_space<vmem>>, vector<1x4x16xf32>,
    %113 = tpu.iota {dimensions = array<i32: 0>} : vector<8x4x16xi32>
    %114 = vector.shape_cast %104 : vector<4x16xi32> to vector<1x4x16xi32>
    %115 = vector.broadcast %114 : vector<1x4x16xi32> to vector<8x4x16xi32>
    %116 = arith.cmpi eq, %113, %115 : vector<8x4x16xi32>
    %117 = arith.extui %116 : vector<8x4x16xi1> to vector<8x4x16xi8>
    %c0_31 = arith.constant 0 : index
    %c0_32 = arith.constant 0 : index
    %c0_33 = arith.constant 0 : index
    %c0_34 = arith.constant 0 : index
    %118 = vector.load %arg4[%c0_31, %c0_32, %c0_33, %c0_34] : memref<3x8x4x16xi8, #tpu.memory_space<vmem>>, vector<1x8x4x16xi8>
    %119 = vector.shape_cast %118 : vector<1x8x4x16xi8> to vector<8x4x16xi8>
    %120 = vector.shape_cast %117 : vector<8x4x16xi8> to vector<1x8x4x16xi8>
    tpu.vector_store %arg4[%c0_31, %c0_32, %c0_33, %c0_34], %120 {strides = array<i32>} : memref<3x8x4x16xi8, #tpu.memory_space<vmem>>, vector<1x8x4x16xi8>,
    %121 = vector.extract_strided_slice %5 {offsets = [8, 0], sizes = [8, 16], strides = [1, 1]} : vector<24x16xf32> to vector<8x16xf32>
    %cst_35 = arith.constant dense<0xFF800000> : vector<16xf32>
    %122 = vector.multi_reduction <maximumf>, %121, %cst_35 [0] : vector<8x16xf32> to vector<16xf32>
    %123 = vector.shape_cast %122 : vector<16xf32> to vector<1x16xf32>
    %124 = vector.broadcast %123 : vector<1x16xf32> to vector<8x16xf32>
    %125 = arith.subf %121, %124 : vector<8x16xf32>
    %126 = math.exp %125 : vector<8x16xf32>
    %cst_36 = arith.constant dense<0.000000e+00> : vector<16xf32>
    %127 = vector.multi_reduction <add>, %126, %cst_36 [0] : vector<8x16xf32> to vector<16xf32>
    %128 = vector.shape_cast %127 : vector<16xf32> to vector<1x16xf32>
    %129 = tpu.reciprocal %128 {approx = true} : vector<1x16xf32> -> vector<1x16xf32>
    %130 = vector.broadcast %129 : vector<1x16xf32> to vector<8x16xf32>
    %131 = arith.mulf %126, %130 : vector<8x16xf32>
    %132 = tpu.iota {dimensions = array<i32: 0>} : vector<8x16xi32>
    %cst_37 = arith.constant 0.000000e+00 : f32
    %133 = vector.broadcast %cst_37 : f32 to vector<4x16xf32>
    %c0_i32_38 = arith.constant 0 : i32
    %134 = vector.broadcast %c0_i32_38 : i32 to vector<4x16xi32>
    %cst_39 = arith.constant dense<0xFF800000> : vector<16xf32>
    %135 = vector.multi_reduction <maximumf>, %131, %cst_39 [0] : vector<8x16xf32> to vector<16xf32>
    %136 = vector.shape_cast %135 : vector<16xf32> to vector<1x16xf32>
    %137 = vector.broadcast %136 : vector<1x16xf32> to vector<8x16xf32>
    %138 = arith.cmpf oge, %131, %137 : vector<8x16xf32>
    %c8_i32_40 = arith.constant 8 : i32
    %139 = vector.broadcast %c8_i32_40 : i32 to vector<8x16xi32>
    %140 = arith.select %138, %132, %139 : vector<8x16xi1>, vector<8x16xi32>
    %cst_41 = arith.constant dense<2147483647> : vector<16xi32>
    %141 = vector.multi_reduction <minsi>, %140, %cst_41 [0] : vector<8x16xi32> to vector<16xi32>
    %142 = vector.shape_cast %141 : vector<16xi32> to vector<1x16xi32>
    %c0_i32_42 = arith.constant 0 : i32
    %143 = vector.broadcast %c0_i32_42 : i32 to vector<4x16xi32>
    %144 = arith.cmpi eq, %6, %143 : vector<4x16xi32>
    %145 = vector.shape_cast %136 : vector<1x16xf32> to vector<1x16xf32>
    %146 = vector.broadcast %145 : vector<1x16xf32> to vector<4x16xf32>
    %147 = arith.select %144, %146, %133 : vector<4x16xi1>, vector<4x16xf32>
    %c0_i32_43 = arith.constant 0 : i32
    %148 = vector.broadcast %c0_i32_43 : i32 to vector<4x16xi32>
    %149 = arith.cmpi eq, %6, %148 : vector<4x16xi32>
    %150 = vector.shape_cast %142 : vector<1x16xi32> to vector<1x16xi32>
    %151 = vector.broadcast %150 : vector<1x16xi32> to vector<4x16xi32>
    %152 = arith.select %149, %151, %134 : vector<4x16xi1>, vector<4x16xi32>
    %153 = vector.broadcast %142 : vector<1x16xi32> to vector<8x16xi32>
    %154 = arith.cmpi eq, %132, %153 : vector<8x16xi32>
    %cst_44 = arith.constant 0xFF800000 : f32
    %155 = vector.broadcast %cst_44 : f32 to vector<8x16xf32>
    %156 = arith.select %154, %155, %131 : vector<8x16xi1>, vector<8x16xf32>
    %cst_45 = arith.constant dense<0xFF800000> : vector<16xf32>
    %157 = vector.multi_reduction <maximumf>, %156, %cst_45 [0] : vector<8x16xf32> to vector<16xf32>
    %158 = vector.shape_cast %157 : vector<16xf32> to vector<1x16xf32>
    %159 = vector.broadcast %158 : vector<1x16xf32> to vector<8x16xf32>
    %160 = arith.cmpf oge, %156, %159 : vector<8x16xf32>
    %c8_i32_46 = arith.constant 8 : i32
    %161 = vector.broadcast %c8_i32_46 : i32 to vector<8x16xi32>
    %162 = arith.select %160, %132, %161 : vector<8x16xi1>, vector<8x16xi32>
    %cst_47 = arith.constant dense<2147483647> : vector<16xi32>
    %163 = vector.multi_reduction <minsi>, %162, %cst_47 [0] : vector<8x16xi32> to vector<16xi32>
    %164 = vector.shape_cast %163 : vector<16xi32> to vector<1x16xi32>
    %c1_i32_48 = arith.constant 1 : i32
    %165 = vector.broadcast %c1_i32_48 : i32 to vector<4x16xi32>
    %166 = arith.cmpi eq, %6, %165 : vector<4x16xi32>
    %167 = vector.shape_cast %158 : vector<1x16xf32> to vector<1x16xf32>
    %168 = vector.broadcast %167 : vector<1x16xf32> to vector<4x16xf32>
    %169 = arith.select %166, %168, %147 : vector<4x16xi1>, vector<4x16xf32>
    %c1_i32_49 = arith.constant 1 : i32
    %170 = vector.broadcast %c1_i32_49 : i32 to vector<4x16xi32>
    %171 = arith.cmpi eq, %6, %170 : vector<4x16xi32>
    %172 = vector.shape_cast %164 : vector<1x16xi32> to vector<1x16xi32>
    %173 = vector.broadcast %172 : vector<1x16xi32> to vector<4x16xi32>
    %174 = arith.select %171, %173, %152 : vector<4x16xi1>, vector<4x16xi32>
    %175 = vector.broadcast %164 : vector<1x16xi32> to vector<8x16xi32>
    %176 = arith.cmpi eq, %132, %175 : vector<8x16xi32>
    %cst_50 = arith.constant 0xFF800000 : f32
    %177 = vector.broadcast %cst_50 : f32 to vector<8x16xf32>
    %178 = arith.select %176, %177, %156 : vector<8x16xi1>, vector<8x16xf32>
    %cst_51 = arith.constant dense<0xFF800000> : vector<16xf32>
    %179 = vector.multi_reduction <maximumf>, %178, %cst_51 [0] : vector<8x16xf32> to vector<16xf32>
    %180 = vector.shape_cast %179 : vector<16xf32> to vector<1x16xf32>
    %181 = vector.broadcast %180 : vector<1x16xf32> to vector<8x16xf32>
    %182 = arith.cmpf oge, %178, %181 : vector<8x16xf32>
    %c8_i32_52 = arith.constant 8 : i32
    %183 = vector.broadcast %c8_i32_52 : i32 to vector<8x16xi32>
    %184 = arith.select %182, %132, %183 : vector<8x16xi1>, vector<8x16xi32>
    %cst_53 = arith.constant dense<2147483647> : vector<16xi32>
    %185 = vector.multi_reduction <minsi>, %184, %cst_53 [0] : vector<8x16xi32> to vector<16xi32>
    %186 = vector.shape_cast %185 : vector<16xi32> to vector<1x16xi32>
    %c2_i32_54 = arith.constant 2 : i32
    %187 = vector.broadcast %c2_i32_54 : i32 to vector<4x16xi32>
    %188 = arith.cmpi eq, %6, %187 : vector<4x16xi32>
    %189 = vector.shape_cast %180 : vector<1x16xf32> to vector<1x16xf32>
    %190 = vector.broadcast %189 : vector<1x16xf32> to vector<4x16xf32>
    %191 = arith.select %188, %190, %169 : vector<4x16xi1>, vector<4x16xf32>
    %c2_i32_55 = arith.constant 2 : i32
    %192 = vector.broadcast %c2_i32_55 : i32 to vector<4x16xi32>
    %193 = arith.cmpi eq, %6, %192 : vector<4x16xi32>
    %194 = vector.shape_cast %186 : vector<1x16xi32> to vector<1x16xi32>
    %195 = vector.broadcast %194 : vector<1x16xi32> to vector<4x16xi32>
    %196 = arith.select %193, %195, %174 : vector<4x16xi1>, vector<4x16xi32>
    %197 = vector.broadcast %186 : vector<1x16xi32> to vector<8x16xi32>
    %198 = arith.cmpi eq, %132, %197 : vector<8x16xi32>
    %cst_56 = arith.constant 0xFF800000 : f32
    %199 = vector.broadcast %cst_56 : f32 to vector<8x16xf32>
    %200 = arith.select %198, %199, %178 : vector<8x16xi1>, vector<8x16xf32>
    %cst_57 = arith.constant dense<0xFF800000> : vector<16xf32>
    %201 = vector.multi_reduction <maximumf>, %200, %cst_57 [0] : vector<8x16xf32> to vector<16xf32>
    %202 = vector.shape_cast %201 : vector<16xf32> to vector<1x16xf32>
    %203 = vector.broadcast %202 : vector<1x16xf32> to vector<8x16xf32>
    %204 = arith.cmpf oge, %200, %203 : vector<8x16xf32>
    %c8_i32_58 = arith.constant 8 : i32
    %205 = vector.broadcast %c8_i32_58 : i32 to vector<8x16xi32>
    %206 = arith.select %204, %132, %205 : vector<8x16xi1>, vector<8x16xi32>
    %cst_59 = arith.constant dense<2147483647> : vector<16xi32>
    %207 = vector.multi_reduction <minsi>, %206, %cst_59 [0] : vector<8x16xi32> to vector<16xi32>
    %208 = vector.shape_cast %207 : vector<16xi32> to vector<1x16xi32>
    %c3_i32_60 = arith.constant 3 : i32
    %209 = vector.broadcast %c3_i32_60 : i32 to vector<4x16xi32>
    %210 = arith.cmpi eq, %6, %209 : vector<4x16xi32>
    %211 = vector.shape_cast %202 : vector<1x16xf32> to vector<1x16xf32>
    %212 = vector.broadcast %211 : vector<1x16xf32> to vector<4x16xf32>
    %213 = arith.select %210, %212, %191 : vector<4x16xi1>, vector<4x16xf32>
    %c3_i32_61 = arith.constant 3 : i32
    %214 = vector.broadcast %c3_i32_61 : i32 to vector<4x16xi32>
    %215 = arith.cmpi eq, %6, %214 : vector<4x16xi32>
    %216 = vector.shape_cast %208 : vector<1x16xi32> to vector<1x16xi32>
    %217 = vector.broadcast %216 : vector<1x16xi32> to vector<4x16xi32>
    %218 = arith.select %215, %217, %196 : vector<4x16xi1>, vector<4x16xi32>
    %cst_62 = arith.constant dense<0.000000e+00> : vector<16xf32>
    %219 = vector.multi_reduction <add>, %213, %cst_62 [0] : vector<4x16xf32> to vector<16xf32>
    %220 = vector.shape_cast %219 : vector<16xf32> to vector<1x16xf32>
    %221 = tpu.reciprocal %220 : vector<1x16xf32> -> vector<1x16xf32>
    %222 = vector.broadcast %221 : vector<1x16xf32> to vector<4x16xf32>
    %223 = arith.mulf %213, %222 : vector<4x16xf32>
    %c1 = arith.constant 1 : index
    %c0_63 = arith.constant 0 : index
    %c0_64 = arith.constant 0 : index
    %224 = vector.load %arg5[%c1, %c0_63, %c0_64] : memref<3x4x16xf32, #tpu.memory_space<vmem>>, vector<1x4x16xf32>
    %225 = vector.shape_cast %224 : vector<1x4x16xf32> to vector<4x16xf32>
    %226 = vector.shape_cast %223 : vector<4x16xf32> to vector<1x4x16xf32>
    tpu.vector_store %arg5[%c1, %c0_63, %c0_64], %226 {strides = array<i32>} : memref<3x4x16xf32, #tpu.memory_space<vmem>>, vector<1x4x16xf32>,
    %227 = tpu.iota {dimensions = array<i32: 0>} : vector<8x4x16xi32>
    %228 = vector.shape_cast %218 : vector<4x16xi32> to vector<1x4x16xi32>
    %229 = vector.broadcast %228 : vector<1x4x16xi32> to vector<8x4x16xi32>
    %230 = arith.cmpi eq, %227, %229 : vector<8x4x16xi32>
    %231 = arith.extui %230 : vector<8x4x16xi1> to vector<8x4x16xi8>
    %c1_65 = arith.constant 1 : index
    %c0_66 = arith.constant 0 : index
    %c0_67 = arith.constant 0 : index
    %c0_68 = arith.constant 0 : index
    %232 = vector.load %arg4[%c1_65, %c0_66, %c0_67, %c0_68] : memref<3x8x4x16xi8, #tpu.memory_space<vmem>>, vector<1x8x4x16xi8>
    %233 = vector.shape_cast %232 : vector<1x8x4x16xi8> to vector<8x4x16xi8>
    %234 = vector.shape_cast %231 : vector<8x4x16xi8> to vector<1x8x4x16xi8>
    tpu.vector_store %arg4[%c1_65, %c0_66, %c0_67, %c0_68], %234 {strides = array<i32>} : memref<3x8x4x16xi8, #tpu.memory_space<vmem>>, vector<1x8x4x16xi8>,
    %235 = vector.extract_strided_slice %5 {offsets = [16, 0], sizes = [8, 16], strides = [1, 1]} : vector<24x16xf32> to vector<8x16xf32>
    %cst_69 = arith.constant dense<0xFF800000> : vector<16xf32>
    %236 = vector.multi_reduction <maximumf>, %235, %cst_69 [0] : vector<8x16xf32> to vector<16xf32>
    %237 = vector.shape_cast %236 : vector<16xf32> to vector<1x16xf32>
    %238 = vector.broadcast %237 : vector<1x16xf32> to vector<8x16xf32>
    %239 = arith.subf %235, %238 : vector<8x16xf32>
    %240 = math.exp %239 : vector<8x16xf32>
    %cst_70 = arith.constant dense<0.000000e+00> : vector<16xf32>
    %241 = vector.multi_reduction <add>, %240, %cst_70 [0] : vector<8x16xf32> to vector<16xf32>
    %242 = vector.shape_cast %241 : vector<16xf32> to vector<1x16xf32>
    %243 = tpu.reciprocal %242 {approx = true} : vector<1x16xf32> -> vector<1x16xf32>
    %244 = vector.broadcast %243 : vector<1x16xf32> to vector<8x16xf32>
    %245 = arith.mulf %240, %244 : vector<8x16xf32>
    %246 = tpu.iota {dimensions = array<i32: 0>} : vector<8x16xi32>
    %cst_71 = arith.constant 0.000000e+00 : f32
    %247 = vector.broadcast %cst_71 : f32 to vector<4x16xf32>
    %c0_i32_72 = arith.constant 0 : i32
    %248 = vector.broadcast %c0_i32_72 : i32 to vector<4x16xi32>
    %cst_73 = arith.constant dense<0xFF800000> : vector<16xf32>
    %249 = vector.multi_reduction <maximumf>, %245, %cst_73 [0] : vector<8x16xf32> to vector<16xf32>
    %250 = vector.shape_cast %249 : vector<16xf32> to vector<1x16xf32>
    %251 = vector.broadcast %250 : vector<1x16xf32> to vector<8x16xf32>
    %252 = arith.cmpf oge, %245, %251 : vector<8x16xf32>
    %c8_i32_74 = arith.constant 8 : i32
    %253 = vector.broadcast %c8_i32_74 : i32 to vector<8x16xi32>
    %254 = arith.select %252, %246, %253 : vector<8x16xi1>, vector<8x16xi32>
    %cst_75 = arith.constant dense<2147483647> : vector<16xi32>
    %255 = vector.multi_reduction <minsi>, %254, %cst_75 [0] : vector<8x16xi32> to vector<16xi32>
    %256 = vector.shape_cast %255 : vector<16xi32> to vector<1x16xi32>
    %c0_i32_76 = arith.constant 0 : i32
    %257 = vector.broadcast %c0_i32_76 : i32 to vector<4x16xi32>
    %258 = arith.cmpi eq, %6, %257 : vector<4x16xi32>
    %259 = vector.shape_cast %250 : vector<1x16xf32> to vector<1x16xf32>
    %260 = vector.broadcast %259 : vector<1x16xf32> to vector<4x16xf32>
    %261 = arith.select %258, %260, %247 : vector<4x16xi1>, vector<4x16xf32>
    %c0_i32_77 = arith.constant 0 : i32
    %262 = vector.broadcast %c0_i32_77 : i32 to vector<4x16xi32>
    %263 = arith.cmpi eq, %6, %262 : vector<4x16xi32>
    %264 = vector.shape_cast %256 : vector<1x16xi32> to vector<1x16xi32>
    %265 = vector.broadcast %264 : vector<1x16xi32> to vector<4x16xi32>
    %266 = arith.select %263, %265, %248 : vector<4x16xi1>, vector<4x16xi32>
    %267 = vector.broadcast %256 : vector<1x16xi32> to vector<8x16xi32>
    %268 = arith.cmpi eq, %246, %267 : vector<8x16xi32>
    %cst_78 = arith.constant 0xFF800000 : f32
    %269 = vector.broadcast %cst_78 : f32 to vector<8x16xf32>
    %270 = arith.select %268, %269, %245 : vector<8x16xi1>, vector<8x16xf32>
    %cst_79 = arith.constant dense<0xFF800000> : vector<16xf32>
    %271 = vector.multi_reduction <maximumf>, %270, %cst_79 [0] : vector<8x16xf32> to vector<16xf32>
    %272 = vector.shape_cast %271 : vector<16xf32> to vector<1x16xf32>
    %273 = vector.broadcast %272 : vector<1x16xf32> to vector<8x16xf32>
    %274 = arith.cmpf oge, %270, %273 : vector<8x16xf32>
    %c8_i32_80 = arith.constant 8 : i32
    %275 = vector.broadcast %c8_i32_80 : i32 to vector<8x16xi32>
    %276 = arith.select %274, %246, %275 : vector<8x16xi1>, vector<8x16xi32>
    %cst_81 = arith.constant dense<2147483647> : vector<16xi32>
    %277 = vector.multi_reduction <minsi>, %276, %cst_81 [0] : vector<8x16xi32> to vector<16xi32>
    %278 = vector.shape_cast %277 : vector<16xi32> to vector<1x16xi32>
    %c1_i32_82 = arith.constant 1 : i32
    %279 = vector.broadcast %c1_i32_82 : i32 to vector<4x16xi32>
    %280 = arith.cmpi eq, %6, %279 : vector<4x16xi32>
    %281 = vector.shape_cast %272 : vector<1x16xf32> to vector<1x16xf32>
    %282 = vector.broadcast %281 : vector<1x16xf32> to vector<4x16xf32>
    %283 = arith.select %280, %282, %261 : vector<4x16xi1>, vector<4x16xf32>
    %c1_i32_83 = arith.constant 1 : i32
    %284 = vector.broadcast %c1_i32_83 : i32 to vector<4x16xi32>
    %285 = arith.cmpi eq, %6, %284 : vector<4x16xi32>
    %286 = vector.shape_cast %278 : vector<1x16xi32> to vector<1x16xi32>
    %287 = vector.broadcast %286 : vector<1x16xi32> to vector<4x16xi32>
    %288 = arith.select %285, %287, %266 : vector<4x16xi1>, vector<4x16xi32>
    %289 = vector.broadcast %278 : vector<1x16xi32> to vector<8x16xi32>
    %290 = arith.cmpi eq, %246, %289 : vector<8x16xi32>
    %cst_84 = arith.constant 0xFF800000 : f32
    %291 = vector.broadcast %cst_84 : f32 to vector<8x16xf32>
    %292 = arith.select %290, %291, %270 : vector<8x16xi1>, vector<8x16xf32>
    %cst_85 = arith.constant dense<0xFF800000> : vector<16xf32>
    %293 = vector.multi_reduction <maximumf>, %292, %cst_85 [0] : vector<8x16xf32> to vector<16xf32>
    %294 = vector.shape_cast %293 : vector<16xf32> to vector<1x16xf32>
    %295 = vector.broadcast %294 : vector<1x16xf32> to vector<8x16xf32>
    %296 = arith.cmpf oge, %292, %295 : vector<8x16xf32>
    %c8_i32_86 = arith.constant 8 : i32
    %297 = vector.broadcast %c8_i32_86 : i32 to vector<8x16xi32>
    %298 = arith.select %296, %246, %297 : vector<8x16xi1>, vector<8x16xi32>
    %cst_87 = arith.constant dense<2147483647> : vector<16xi32>
    %299 = vector.multi_reduction <minsi>, %298, %cst_87 [0] : vector<8x16xi32> to vector<16xi32>
    %300 = vector.shape_cast %299 : vector<16xi32> to vector<1x16xi32>
    %c2_i32_88 = arith.constant 2 : i32
    %301 = vector.broadcast %c2_i32_88 : i32 to vector<4x16xi32>
    %302 = arith.cmpi eq, %6, %301 : vector<4x16xi32>
    %303 = vector.shape_cast %294 : vector<1x16xf32> to vector<1x16xf32>
    %304 = vector.broadcast %303 : vector<1x16xf32> to vector<4x16xf32>
    %305 = arith.select %302, %304, %283 : vector<4x16xi1>, vector<4x16xf32>
    %c2_i32_89 = arith.constant 2 : i32
    %306 = vector.broadcast %c2_i32_89 : i32 to vector<4x16xi32>
    %307 = arith.cmpi eq, %6, %306 : vector<4x16xi32>
    %308 = vector.shape_cast %300 : vector<1x16xi32> to vector<1x16xi32>
    %309 = vector.broadcast %308 : vector<1x16xi32> to vector<4x16xi32>
    %310 = arith.select %307, %309, %288 : vector<4x16xi1>, vector<4x16xi32>
    %311 = vector.broadcast %300 : vector<1x16xi32> to vector<8x16xi32>
    %312 = arith.cmpi eq, %246, %311 : vector<8x16xi32>
    %cst_90 = arith.constant 0xFF800000 : f32
    %313 = vector.broadcast %cst_90 : f32 to vector<8x16xf32>
    %314 = arith.select %312, %313, %292 : vector<8x16xi1>, vector<8x16xf32>
    %cst_91 = arith.constant dense<0xFF800000> : vector<16xf32>
    %315 = vector.multi_reduction <maximumf>, %314, %cst_91 [0] : vector<8x16xf32> to vector<16xf32>
    %316 = vector.shape_cast %315 : vector<16xf32> to vector<1x16xf32>
    %317 = vector.broadcast %316 : vector<1x16xf32> to vector<8x16xf32>
    %318 = arith.cmpf oge, %314, %317 : vector<8x16xf32>
    %c8_i32_92 = arith.constant 8 : i32
    %319 = vector.broadcast %c8_i32_92 : i32 to vector<8x16xi32>
    %320 = arith.select %318, %246, %319 : vector<8x16xi1>, vector<8x16xi32>
    %cst_93 = arith.constant dense<2147483647> : vector<16xi32>
    %321 = vector.multi_reduction <minsi>, %320, %cst_93 [0] : vector<8x16xi32> to vector<16xi32>
    %322 = vector.shape_cast %321 : vector<16xi32> to vector<1x16xi32>
    %c3_i32_94 = arith.constant 3 : i32
    %323 = vector.broadcast %c3_i32_94 : i32 to vector<4x16xi32>
    %324 = arith.cmpi eq, %6, %323 : vector<4x16xi32>
    %325 = vector.shape_cast %316 : vector<1x16xf32> to vector<1x16xf32>
    %326 = vector.broadcast %325 : vector<1x16xf32> to vector<4x16xf32>
    %327 = arith.select %324, %326, %305 : vector<4x16xi1>, vector<4x16xf32>
    %c3_i32_95 = arith.constant 3 : i32
    %328 = vector.broadcast %c3_i32_95 : i32 to vector<4x16xi32>
    %329 = arith.cmpi eq, %6, %328 : vector<4x16xi32>
    %330 = vector.shape_cast %322 : vector<1x16xi32> to vector<1x16xi32>
    %331 = vector.broadcast %330 : vector<1x16xi32> to vector<4x16xi32>
    %332 = arith.select %329, %331, %310 : vector<4x16xi1>, vector<4x16xi32>
    %cst_96 = arith.constant dense<0.000000e+00> : vector<16xf32>
    %333 = vector.multi_reduction <add>, %327, %cst_96 [0] : vector<4x16xf32> to vector<16xf32>
    %334 = vector.shape_cast %333 : vector<16xf32> to vector<1x16xf32>
    %335 = tpu.reciprocal %334 : vector<1x16xf32> -> vector<1x16xf32>
    %336 = vector.broadcast %335 : vector<1x16xf32> to vector<4x16xf32>
    %337 = arith.mulf %327, %336 : vector<4x16xf32>
    %c2 = arith.constant 2 : index
    %c0_97 = arith.constant 0 : index
    %c0_98 = arith.constant 0 : index
    %338 = vector.load %arg5[%c2, %c0_97, %c0_98] : memref<3x4x16xf32, #tpu.memory_space<vmem>>, vector<1x4x16xf32>
    %339 = vector.shape_cast %338 : vector<1x4x16xf32> to vector<4x16xf32>
    %340 = vector.shape_cast %337 : vector<4x16xf32> to vector<1x4x16xf32>
    tpu.vector_store %arg5[%c2, %c0_97, %c0_98], %340 {strides = array<i32>} : memref<3x4x16xf32, #tpu.memory_space<vmem>>, vector<1x4x16xf32>,
    %341 = tpu.iota {dimensions = array<i32: 0>} : vector<8x4x16xi32>
    %342 = vector.shape_cast %332 : vector<4x16xi32> to vector<1x4x16xi32>
    %343 = vector.broadcast %342 : vector<1x4x16xi32> to vector<8x4x16xi32>
    %344 = arith.cmpi eq, %341, %343 : vector<8x4x16xi32>
    %345 = arith.extui %344 : vector<8x4x16xi1> to vector<8x4x16xi8>
    %c2_99 = arith.constant 2 : index
    %c0_100 = arith.constant 0 : index
    %c0_101 = arith.constant 0 : index
    %c0_102 = arith.constant 0 : index
    %346 = vector.load %arg4[%c2_99, %c0_100, %c0_101, %c0_102] : memref<3x8x4x16xi8, #tpu.memory_space<vmem>>, vector<1x8x4x16xi8>
    %347 = vector.shape_cast %346 : vector<1x8x4x16xi8> to vector<8x4x16xi8>
    %348 = vector.shape_cast %345 : vector<8x4x16xi8> to vector<1x8x4x16xi8>
    tpu.vector_store %arg4[%c2_99, %c0_100, %c0_101, %c0_102], %348 {strides = array<i32>} : memref<3x8x4x16xi8, #tpu.memory_space<vmem>>, vector<1x8x4x16xi8>,
    return
  }
  func.func @transform_0(%arg0: i32) -> (i32, i32) {
    %c0_i32 = arith.constant 0 : i32
    %c0_i32_0 = arith.constant 0 : i32
    return %arg0, %c0_i32 : i32, i32
  }
  func.func @transform_1(%arg0: i32) -> (i32, i32) {
    %c0_i32 = arith.constant 0 : i32
    %c0_i32_0 = arith.constant 0 : i32
    %c0_i32_1 = arith.constant 0 : i32
    return %c0_i32, %c0_i32_0 : i32, i32
  }
  func.func @transform_2(%arg0: i32) -> (i32, i32) {
    %c0_i32 = arith.constant 0 : i32
    %c0_i32_0 = arith.constant 0 : i32
    %c0_i32_1 = arith.constant 0 : i32
    return %c0_i32, %c0_i32_0 : i32, i32
  }
  func.func @transform_3(%arg0: i32) -> (i32, i32, i32, i32) {
    %c0_i32 = arith.constant 0 : i32
    %c0_i32_0 = arith.constant 0 : i32
    %c0_i32_1 = arith.constant 0 : i32
    %c0_i32_2 = arith.constant 0 : i32
    return %c0_i32, %c0_i32_0, %c0_i32_1, %arg0 : i32, i32, i32, i32
  }
  func.func @transform_4(%arg0: i32) -> (i32, i32, i32) {
    %c0_i32 = arith.constant 0 : i32
    %c0_i32_0 = arith.constant 0 : i32
    %c0_i32_1 = arith.constant 0 : i32
    return %c0_i32, %c0_i32_0, %arg0 : i32, i32, i32
  }
}

</mosaic_0001>

<llo_original>
// kernel: tpu_custom_call.1
$region0: #{tpu_custom_call.1}
  #allocation0 [shape = 'u32[]', space=smem, size = 0x4, offset = 0x4, fixed_abs, tag = 'smem constant byte address 0x4 - core index']
  #allocation1 [shape = 'u32[144,128]{1,0:T(1,128)}', space=vmem, size = 0x12000, scoped, tag = 'internal scratch']
  %s0 = inlined_call_operand.hbm [shape: f32[16,32], index: 0, kind: input, shape index: {}]
  %s1 = inlined_call_operand.vmem [shape: f32[24,32], index: 1, kind: input, shape index: {}]
  %s2 = inlined_call_operand.vmem [shape: f32[24,1], index: 2, kind: input, shape index: {}]
  %s3 = inlined_call_operand.hbm [shape: s8[3,8,4,16], index: 3, kind: output, shape index: {0}]
  %s4 = inlined_call_operand.hbm [shape: f32[3,4,16], index: 4, kind: output, shape index: {1}]
  %5 = xla_tuple %s3, %s4
  %s6 = sld [smem:[#allocation0]]
  $region34: #{tpu_custom_call.1} parent=0
    _
  %s8 = ssub.s32 1, %s6
  %s9 = scalar_select 0, %s8, %s6
  $region1: #{tpu_custom_call.1} parent=0
    #allocation2 [shape = 'u8[8192]{0}', space=vmem, size = 0x2000, scoped, tag = 'input window, operand 0, single buffered']
    #allocation3 [shape = 's32[1]{0}', space=sflag, size = 0x4, scoped, tag = 'scoped memory for tpu_custom_call.1']
    #allocation4 [shape = 's32[1]{0}', space=sflag, size = 0x4, scoped, tag = 'scoped memory for tpu_custom_call.1']
    #allocation5 [shape = 'u8[12288]{0}', space=vmem, size = 0x3000, scoped, tag = 'output window, operand 0, single buffered']
    #allocation6 [shape = 'u8[6144]{0}', space=vmem, size = 0x1800, scoped, tag = 'output window, operand 1, single buffered']
    #allocation7 [shape = 's32[1]{0}', space=sflag, size = 0x4, scoped, tag = 'scoped memory for tpu_custom_call.1']
    %10 = vsyncpa [#allocation3], 0
    %11 = vsyncpa [#allocation4], 0
    %12 = vsyncpa [#allocation7], 0
    // Predicated region
    $region2: #{tpu_custom_call.1} parent=1 // pred_check
      _
    $region3: #{tpu_custom_call.1} parent=1 // pred_check_branch
      %14 = sbr.rel (0) target = $region5
    $region4: #{tpu_custom_call.1} parent=1 // pred_region
      %s16 = ssub.s32 256, 256
      %17 = vsyncadd [#allocation3], %s16
      %s18 = sshll.u32 [#allocation2], 4
      %s19 = int_to_ptr.vmem [resolvable:$true] %s18
      %24 = dma.hbm_to_vmem [thread:$0]  %s0, 256, %s19, [#allocation3], 128, 128, 8
    $region5: #{tpu_custom_call.1} parent=1 // pred_fallthru
      _
    // Predicated region
    $region6: #{tpu_custom_call.1} parent=1 // pred_check
      _
    $region7: #{tpu_custom_call.1} parent=1 // pred_check_branch
      %26 = sbr.rel (0) target = $region9
    $region8: #{tpu_custom_call.1} parent=1 // pred_region
      _
    $region9: #{tpu_custom_call.1} parent=1 // pred_fallthru
      _
    // Predicated region
    $region10: #{tpu_custom_call.1} parent=1 // pred_check
      _
    $region11: #{tpu_custom_call.1} parent=1 // pred_check_branch
      %28 = sbr.rel (0) target = $region13
    $region12: #{tpu_custom_call.1} parent=1 // pred_region
      _
    $region13: #{tpu_custom_call.1} parent=1 // pred_fallthru
      _
    // Predicated region
    $region14: #{tpu_custom_call.1} parent=1 // pred_check
      _
    $region15: #{tpu_custom_call.1} parent=1 // pred_check_branch
      %30 = sbr.rel (0) target = $region17
    $region16: #{tpu_custom_call.1} parent=1 // pred_region
      %31 = dma.done [#allocation3], 256
    $region17: #{tpu_custom_call.1} parent=1 // pred_fallthru
      _
    %v34 = vld [vmem:[%s1] sm:$0xff]
    %v35 = vld [vmem:[%s1 + $0x8] sm:$0xff]
    %v36 = vld [vmem:[%s1 + $0x10] sm:$0xff]
    %v37 = vld [vmem:[#allocation2] sm:$0xff]
    %v38 = vld [vmem:[#allocation2 + $0x8] sm:$0xff]
    %v39 = vld [vmem:[%s2] sm:$0xff]
    %v40 = vld [vmem:[%s2 + $0x8] sm:$0xff]
    %v41 = vld [vmem:[%s2 + $0x10] sm:$0xff]
    %43 = vset.pattern.permute.xlu0 0
    %44 = vperm.xlu0 %43, %v39
    %v45 = vpop.permute.xlu0 %44
    %48 = vset.pattern.permute.xlu0 0
    %49 = vperm.xlu0 %48, %v40
    %v50 = vpop.permute.xlu0 %49
    %53 = vset.pattern.permute.xlu0 0
    %54 = vperm.xlu0 %53, %v41
    %v55 = vpop.permute.xlu0 %54
    %vm57 = vcmask 261120
    %v59 = vsel %vm57, %v34, 0
    %v62 = vsel %vm57, %v35, 0
    %v65 = vsel %vm57, %v36, 0
    %v68 = vsel %vm57, %v37, 0
    %v71 = vsel %vm57, %v38, 0
    %73 = vmatprep.subr.mxu0 0.0
    %74 = vmatpush1.xpose.msra.mxu0 %v68
    %75 = vmatprep.subr.mxu0 0.0
    %76 = vmatpush1.xpose.msra.mxu0 %v71
    %77 = vmatprep.subr.mxu0 0.0
    %78 = vmatpush1.xpose.msra.mxu0 0.0
    %79 = vmatprep.subr.mxu0 0.0
    %80 = vmatpush1.xpose.msra.mxu0 0.0
    %81 = vmatprep.subr.mxu0 0.0
    %82 = vmatpush1.xpose.msra.mxu0 0.0
    %83 = vmatprep.subr.mxu0 0.0
    %84 = vmatpush1.xpose.msra.mxu0 0.0
    %85 = vmatprep.subr.mxu0 0.0
    %86 = vmatpush1.xpose.msra.mxu0 0.0
    %87 = vmatprep.subr.mxu0 0.0
    %88 = vmatpush1.xpose.msra.mxu0 0.0
    %89 = vmatprep.subr.mxu0 0.0
    %90 = vmatpush1.xpose.msra.mxu0 0.0
    %91 = vmatprep.subr.mxu0 0.0
    %92 = vmatpush1.xpose.msra.mxu0 0.0
    %93 = vmatprep.subr.mxu0 0.0
    %94 = vmatpush1.xpose.msra.mxu0 0.0
    %95 = vmatprep.subr.mxu0 0.0
    %96 = vmatpush1.xpose.msra.mxu0 0.0
    %97 = vmatprep.subr.mxu0 0.0
    %98 = vmatpush1.xpose.msra.mxu0 0.0
    %99 = vmatprep.subr.mxu0 0.0
    %100 = vmatpush1.xpose.msra.mxu0 0.0
    %101 = vmatprep.subr.mxu0 0.0
    %102 = vmatpush1.xpose.msra.mxu0 0.0
    %103 = vmatprep.subr.mxu0 0.0
    %104 = vmatpush1.xpose.msra.mxu0 0.0
    %105 = vmatprep.subr.mxu0 0.0
    %106 = vmatpush1.xpose.msra.mxu0 0.0
    %107 = vmatprep.subr.mxu0 0.0
    %108 = vmatpush1.xpose.msra.mxu0 0.0
    %109 = vmatprep.subr.mxu0 0.0
    %110 = vmatpush1.xpose.msra.mxu0 0.0
    %111 = vmatprep.subr.mxu0 0.0
    %112 = vmatpush1.xpose.msra.mxu0 0.0
    %113 = vmatprep.subr.mxu0 0.0
    %114 = vmatpush1.xpose.msra.mxu0 0.0
    %115 = vmatprep.subr.mxu0 0.0
    %116 = vmatpush1.xpose.msra.mxu0 0.0
    %117 = vmatprep.subr.mxu0 0.0
    %118 = vmatpush1.xpose.msra.mxu0 0.0
    %119 = vmatprep.subr.mxu0 0.0
    %120 = vmatpush1.xpose.msra.mxu0 0.0
    %121 = vmatprep.subr.mxu0 0.0
    %122 = vmatpush1.xpose.msra.mxu0 0.0
    %123 = vmatprep.subr.mxu0 0.0
    %124 = vmatpush1.xpose.msra.mxu0 0.0
    %125 = vmatprep.subr.mxu0 0.0
    %126 = vmatpush1.xpose.msra.mxu0 0.0
    %127 = vmatprep.subr.mxu0 0.0
    %128 = vmatpush1.xpose.msra.mxu0 0.0
    %129 = vmatprep.subr.mxu0 0.0
    %130 = vmatpush1.xpose.msra.mxu0 0.0
    %131 = vmatprep.subr.mxu0 0.0
    %132 = vmatpush1.xpose.msra.mxu0 0.0
    %133 = vmatprep.subr.mxu0 0.0
    %134 = vmatpush1.xpose.msra.mxu0 0.0
    %135 = vmatprep.subr.mxu0 0.0
    %136 = vmatpush1.xpose.msra.mxu0 0.0
    %137 = vmatprep.mubr.f32.mxu0 0.0
    %138 = vmatmul.mubr.f32.gmra.mrb[0].mxu0 %v59
    %v139 = vpop.f32.mrb[0].mxu0
    %v140 = vadd.f32 %v45, %v139
    %v141 = vpop.f32.mrb[0].mxu0
    %142 = vmatprep.mubr.f32.mxu0 0.0
    %143 = vmatmul.mubr.f32.gmra.mrb[0].mxu0 %v62
    %v144 = vpop.f32.mrb[0].mxu0
    %v145 = vadd.f32 %v50, %v144
    %v146 = vpop.f32.mrb[0].mxu0
    %147 = vmatprep.mubr.f32.mxu0 0.0
    %148 = vmatmul.mubr.f32.gmra.mrb[0].mxu0 %v65
    %v149 = vpop.f32.mrb[0].mxu0
    %v150 = vadd.f32 %v55, %v149
    %v151 = vpop.f32.mrb[0].mxu0
    %152 = vdwg.mxu0
    %v153 = vlaneseq
    %v154 = vshrl.u32 %v153, 7
    %vm155 = vcmask 130048
    %v156 = vsel %vm155, %v140, -inf
    %v157 = vrot.slane %v156, 4
    %v158 = vmax.f32 %v156, %v157
    %v159 = vrot.slane %v158, 2
    %v160 = vmax.f32 %v158, %v159
    %v161 = vrot.slane %v160, 1
    %v162 = vmax.f32 %v160, %v161
    %v163 = vsub.f32 %v140, %v162
    %v164 = vmul.f32 %v163, 1.442695
    %v165 = vpow.pop %v164
    %v166 = vsel %vm155, %v165, 0.0
    %v167 = vrot.slane %v166, 4
    %v168 = vadd.f32 %v166, %v167
    %v169 = vrot.slane %v168, 2
    %v170 = vadd.f32 %v168, %v169
    %v171 = vrot.slane %v170, 1
    %v172 = vadd.f32 %v170, %v171
    %v173 = vrcp.pop %v172
    %v174 = vmul.f32 %v165, %v173
    %v175 = vsel %vm155, %v174, -inf
    %v176 = vrot.slane %v175, 4
    %v177 = vmax.f32 %v175, %v176
    %v178 = vrot.slane %v177, 2
    %v179 = vmax.f32 %v177, %v178
    %v180 = vrot.slane %v179, 1
    %v181 = vmax.f32 %v179, %v180
    %vm182 = vcmp.ge.f32.partialorder %v174, %v181
    %v183 = vsel %vm182, %v154, 8
    %v184 = vsel %vm155, %v183, 2147483647
    %v185 = vrot.slane %v184, 4
    %vm186 = vcmp.lt.s32.totalorder %v184, %v185
    %v187 = vsel %vm186, %v184, %v185
    %v188 = vrot.slane %v187, 2
    %vm189 = vcmp.lt.s32.totalorder %v187, %v188
    %v190 = vsel %vm189, %v187, %v188
    %v191 = vrot.slane %v190, 1
    %vm192 = vcmp.lt.s32.totalorder %v190, %v191
    %v193 = vsel %vm192, %v190, %v191
    %vm194 = vcmp.eq.s32.totalorder %v154, 0
    %v195 = vsel %vm194, %v181, 0.0
    %v196 = vsel %vm194, %v193, 0
    %vm197 = vcmp.eq.s32.totalorder %v154, %v193
    %v198 = vsel %vm197, -inf, %v174
    %v199 = vsel %vm155, %v198, -inf
    %v200 = vrot.slane %v199, 4
    %v201 = vmax.f32 %v199, %v200
    %v202 = vrot.slane %v201, 2
    %v203 = vmax.f32 %v201, %v202
    %v204 = vrot.slane %v203, 1
    %v205 = vmax.f32 %v203, %v204
    %vm206 = vcmp.ge.f32.partialorder %v198, %v205
    %v207 = vsel %vm206, %v154, 8
    %v208 = vsel %vm155, %v207, 2147483647
    %v209 = vrot.slane %v208, 4
    %vm210 = vcmp.lt.s32.totalorder %v208, %v209
    %v211 = vsel %vm210, %v208, %v209
    %v212 = vrot.slane %v211, 2
    %vm213 = vcmp.lt.s32.totalorder %v211, %v212
    %v214 = vsel %vm213, %v211, %v212
    %v215 = vrot.slane %v214, 1
    %vm216 = vcmp.lt.s32.totalorder %v214, %v215
    %v217 = vsel %vm216, %v214, %v215
    %vm218 = vcmp.eq.s32.totalorder %v154, 1
    %v219 = vsel %vm218, %v205, %v195
    %v220 = vsel %vm218, %v217, %v196
    %vm221 = vcmp.eq.s32.totalorder %v154, %v217
    %v222 = vsel %vm221, -inf, %v198
    %v223 = vsel %vm155, %v222, -inf
    %v224 = vrot.slane %v223, 4
    %v225 = vmax.f32 %v223, %v224
    %v226 = vrot.slane %v225, 2
    %v227 = vmax.f32 %v225, %v226
    %v228 = vrot.slane %v227, 1
    %v229 = vmax.f32 %v227, %v228
    %vm230 = vcmp.ge.f32.partialorder %v222, %v229
    %v231 = vsel %vm230, %v154, 8
    %v232 = vsel %vm155, %v231, 2147483647
    %v233 = vrot.slane %v232, 4
    %vm234 = vcmp.lt.s32.totalorder %v232, %v233
    %v235 = vsel %vm234, %v232, %v233
    %v236 = vrot.slane %v235, 2
    %vm237 = vcmp.lt.s32.totalorder %v235, %v236
    %v238 = vsel %vm237, %v235, %v236
    %v239 = vrot.slane %v238, 1
    %vm240 = vcmp.lt.s32.totalorder %v238, %v239
    %v241 = vsel %vm240, %v238, %v239
    %vm242 = vcmp.eq.s32.totalorder %v154, 2
    %v243 = vsel %vm242, %v229, %v219
    %v244 = vsel %vm242, %v241, %v220
    %vm245 = vcmp.eq.s32.totalorder %v154, %v241
    %v246 = vsel %vm245, -inf, %v222
    %v247 = vsel %vm155, %v246, -inf
    %v248 = vrot.slane %v247, 4
    %v249 = vmax.f32 %v247, %v248
    %v250 = vrot.slane %v249, 2
    %v251 = vmax.f32 %v249, %v250
    %v252 = vrot.slane %v251, 1
    %v253 = vmax.f32 %v251, %v252
    %vm254 = vcmp.ge.f32.partialorder %v246, %v253
    %v255 = vsel %vm254, %v154, 8
    %v256 = vsel %vm155, %v255, 2147483647
    %v257 = vrot.slane %v256, 4
    %vm258 = vcmp.lt.s32.totalorder %v256, %v257
    %v259 = vsel %vm258, %v256, %v257
    %v260 = vrot.slane %v259, 2
    %vm261 = vcmp.lt.s32.totalorder %v259, %v260
    %v262 = vsel %vm261, %v259, %v260
    %v263 = vrot.slane %v262, 1
    %vm264 = vcmp.lt.s32.totalorder %v262, %v263
    %v265 = vsel %vm264, %v262, %v263
    %vm266 = vcmp.eq.s32.totalorder %v154, 3
    %v267 = vsel %vm266, %v253, %v243
    %v268 = vsel %vm266, %v265, %v244
    %vm269 = vcmask 125952
    %v270 = vsel %vm269, %v267, 0.0
    %v271 = vrot.slane %v270, 4
    %v272 = vadd.f32 %v270, %v271
    %v273 = vrot.slane %v272, 2
    %v274 = vadd.f32 %v272, %v273
    %v275 = vrot.slane %v274, 1
    %v276 = vadd.f32 %v274, %v275
    %v277 = vrcp.pop %v276
    %v278 = vmul.f32 %v267, %v277
    %279 = vst.msk [vmem:[#allocation6] sm:$0xf] %vm269, %v278
    %vm280 = vcmp.eq.s32.totalorder %v268, 0
    %vm281 = vcmp.eq.s32.totalorder %v268, 1
    %vm282 = vcmp.eq.s32.totalorder %v268, 2
    %vm283 = vcmp.eq.s32.totalorder %v268, 3
    %vm284 = vcmp.eq.s32.totalorder %v268, 4
    %vm285 = vcmp.eq.s32.totalorder %v268, 5
    %vm286 = vcmp.eq.s32.totalorder %v268, 6
    %vm287 = vcmp.eq.s32.totalorder %v268, 7
    %vm288 = vmpackc.low %vm280, %vm280
    %vm289 = vmpackc.even %vm288, %vm288
    %vm290 = vmpackc.low %vm281, %vm281
    %vm291 = vmpackc.even %vm290, %vm290
    %vm292 = vmpackc.low %vm282, %vm282
    %vm293 = vmpackc.even %vm292, %vm292
    %vm294 = vmpackc.low %vm283, %vm283
    %vm295 = vmpackc.even %vm294, %vm294
    %vm296 = vmpackc.low %vm284, %vm284
    %vm297 = vmpackc.even %vm296, %vm296
    %vm298 = vmpackc.low %vm285, %vm285
    %vm299 = vmpackc.even %vm298, %vm298
    %vm300 = vmpackc.low %vm286, %vm286
    %vm301 = vmpackc.even %vm300, %vm300
    %vm302 = vmpackc.low %vm287, %vm287
    %vm303 = vmpackc.even %vm302, %vm302
    %v304 = vsel %vm289, 16843009, 0
    %v305 = vsel %vm291, 16843009, 0
    %v306 = vsel %vm293, 16843009, 0
    %v307 = vsel %vm295, 16843009, 0
    %v308 = vsel %vm297, 16843009, 0
    %v309 = vsel %vm299, 16843009, 0
    %v310 = vsel %vm301, 16843009, 0
    %v311 = vsel %vm303, 16843009, 0
    %vm312 = vcmask 122880
    %313 = vst.msk [vmem:[#allocation5] sm:$0x1] %vm312, %v304
    %314 = vst.msk [vmem:[#allocation5 + $0x1] sm:$0x1] %vm312, %v305
    %315 = vst.msk [vmem:[#allocation5 + $0x2] sm:$0x1] %vm312, %v306
    %316 = vst.msk [vmem:[#allocation5 + $0x3] sm:$0x1] %vm312, %v307
    %317 = vst.msk [vmem:[#allocation5 + $0x4] sm:$0x1] %vm312, %v308
    %318 = vst.msk [vmem:[#allocation5 + $0x5] sm:$0x1] %vm312, %v309
    %319 = vst.msk [vmem:[#allocation5 + $0x6] sm:$0x1] %vm312, %v310
    %320 = vst.msk [vmem:[#allocation5 + $0x7] sm:$0x1] %vm312, %v311
    %v321 = vsel %vm155, %v145, -inf
    %v322 = vrot.slane %v321, 4
    %v323 = vmax.f32 %v321, %v322
    %v324 = vrot.slane %v323, 2
    %v325 = vmax.f32 %v323, %v324
    %v326 = vrot.slane %v325, 1
    %v327 = vmax.f32 %v325, %v326
    %v328 = vsub.f32 %v145, %v327
    %v329 = vmul.f32 %v328, 1.442695
    %v330 = vpow.pop %v329
    %v331 = vsel %vm155, %v330, 0.0
    %v332 = vrot.slane %v331, 4
    %v333 = vadd.f32 %v331, %v332
    %v334 = vrot.slane %v333, 2
    %v335 = vadd.f32 %v333, %v334
    %v336 = vrot.slane %v335, 1
    %v337 = vadd.f32 %v335, %v336
    %v338 = vrcp.pop %v337
    %v339 = vmul.f32 %v330, %v338
    %v340 = vsel %vm155, %v339, -inf
    %v341 = vrot.slane %v340, 4
    %v342 = vmax.f32 %v340, %v341
    %v343 = vrot.slane %v342, 2
    %v344 = vmax.f32 %v342, %v343
    %v345 = vrot.slane %v344, 1
    %v346 = vmax.f32 %v344, %v345
    %vm347 = vcmp.ge.f32.partialorder %v339, %v346
    %v348 = vsel %vm347, %v154, 8
    %v349 = vsel %vm155, %v348, 2147483647
    %v350 = vrot.slane %v349, 4
    %vm351 = vcmp.lt.s32.totalorder %v349, %v350
    %v352 = vsel %vm351, %v349, %v350
    %v353 = vrot.slane %v352, 2
    %vm354 = vcmp.lt.s32.totalorder %v352, %v353
    %v355 = vsel %vm354, %v352, %v353
    %v356 = vrot.slane %v355, 1
    %vm357 = vcmp.lt.s32.totalorder %v355, %v356
    %v358 = vsel %vm357, %v355, %v356
    %v359 = vsel %vm194, %v346, 0.0
    %v360 = vsel %vm194, %v358, 0
    %vm361 = vcmp.eq.s32.totalorder %v154, %v358
    %v362 = vsel %vm361, -inf, %v339
    %v363 = vsel %vm155, %v362, -inf
    %v364 = vrot.slane %v363, 4
    %v365 = vmax.f32 %v363, %v364
    %v366 = vrot.slane %v365, 2
    %v367 = vmax.f32 %v365, %v366
    %v368 = vrot.slane %v367, 1
    %v369 = vmax.f32 %v367, %v368
    %vm370 = vcmp.ge.f32.partialorder %v362, %v369
    %v371 = vsel %vm370, %v154, 8
    %v372 = vsel %vm155, %v371, 2147483647
    %v373 = vrot.slane %v372, 4
    %vm374 = vcmp.lt.s32.totalorder %v372, %v373
    %v375 = vsel %vm374, %v372, %v373
    %v376 = vrot.slane %v375, 2
    %vm377 = vcmp.lt.s32.totalorder %v375, %v376
    %v378 = vsel %vm377, %v375, %v376
    %v379 = vrot.slane %v378, 1
    %vm380 = vcmp.lt.s32.totalorder %v378, %v379
    %v381 = vsel %vm380, %v378, %v379
    %v382 = vsel %vm218, %v369, %v359
    %v383 = vsel %vm218, %v381, %v360
    %vm384 = vcmp.eq.s32.totalorder %v154, %v381
    %v385 = vsel %vm384, -inf, %v362
    %v386 = vsel %vm155, %v385, -inf
    %v387 = vrot.slane %v386, 4
    %v388 = vmax.f32 %v386, %v387
    %v389 = vrot.slane %v388, 2
    %v390 = vmax.f32 %v388, %v389
    %v391 = vrot.slane %v390, 1
    %v392 = vmax.f32 %v390, %v391
    %vm393 = vcmp.ge.f32.partialorder %v385, %v392
    %v394 = vsel %vm393, %v154, 8
    %v395 = vsel %vm155, %v394, 2147483647
    %v396 = vrot.slane %v395, 4
    %vm397 = vcmp.lt.s32.totalorder %v395, %v396
    %v398 = vsel %vm397, %v395, %v396
    %v399 = vrot.slane %v398, 2
    %vm400 = vcmp.lt.s32.totalorder %v398, %v399
    %v401 = vsel %vm400, %v398, %v399
    %v402 = vrot.slane %v401, 1
    %vm403 = vcmp.lt.s32.totalorder %v401, %v402
    %v404 = vsel %vm403, %v401, %v402
    %v405 = vsel %vm242, %v392, %v382
    %v406 = vsel %vm242, %v404, %v383
    %vm407 = vcmp.eq.s32.totalorder %v154, %v404
    %v408 = vsel %vm407, -inf, %v385
    %v409 = vsel %vm155, %v408, -inf
    %v410 = vrot.slane %v409, 4
    %v411 = vmax.f32 %v409, %v410
    %v412 = vrot.slane %v411, 2
    %v413 = vmax.f32 %v411, %v412
    %v414 = vrot.slane %v413, 1
    %v415 = vmax.f32 %v413, %v414
    %vm416 = vcmp.ge.f32.partialorder %v408, %v415
    %v417 = vsel %vm416, %v154, 8
    %v418 = vsel %vm155, %v417, 2147483647
    %v419 = vrot.slane %v418, 4
    %vm420 = vcmp.lt.s32.totalorder %v418, %v419
    %v421 = vsel %vm420, %v418, %v419
    %v422 = vrot.slane %v421, 2
    %vm423 = vcmp.lt.s32.totalorder %v421, %v422
    %v424 = vsel %vm423, %v421, %v422
    %v425 = vrot.slane %v424, 1
    %vm426 = vcmp.lt.s32.totalorder %v424, %v425
    %v427 = vsel %vm426, %v424, %v425
    %v428 = vsel %vm266, %v415, %v405
    %v429 = vsel %vm266, %v427, %v406
    %v430 = vsel %vm269, %v428, 0.0
    %v431 = vrot.slane %v430, 4
    %v432 = vadd.f32 %v430, %v431
    %v433 = vrot.slane %v432, 2
    %v434 = vadd.f32 %v432, %v433
    %v435 = vrot.slane %v434, 1
    %v436 = vadd.f32 %v434, %v435
    %v437 = vrcp.pop %v436
    %v438 = vmul.f32 %v428, %v437
    %s439 = scalar_lea.vmem [#allocation6], 4
    %440 = vst.msk [vmem:[%s439] sm:$0xf] %vm269, %v438
    %vm441 = vcmp.eq.s32.totalorder %v429, 0
    %vm442 = vcmp.eq.s32.totalorder %v429, 1
    %vm443 = vcmp.eq.s32.totalorder %v429, 2
    %vm444 = vcmp.eq.s32.totalorder %v429, 3
    %vm445 = vcmp.eq.s32.totalorder %v429, 4
    %vm446 = vcmp.eq.s32.totalorder %v429, 5
    %vm447 = vcmp.eq.s32.totalorder %v429, 6
    %vm448 = vcmp.eq.s32.totalorder %v429, 7
    %vm449 = vmpackc.low %vm441, %vm441
    %vm450 = vmpackc.even %vm449, %vm449
    %vm451 = vmpackc.low %vm442, %vm442
    %vm452 = vmpackc.even %vm451, %vm451
    %vm453 = vmpackc.low %vm443, %vm443
    %vm454 = vmpackc.even %vm453, %vm453
    %vm455 = vmpackc.low %vm444, %vm444
    %vm456 = vmpackc.even %vm455, %vm455
    %vm457 = vmpackc.low %vm445, %vm445
    %vm458 = vmpackc.even %vm457, %vm457
    %vm459 = vmpackc.low %vm446, %vm446
    %vm460 = vmpackc.even %vm459, %vm459
    %vm461 = vmpackc.low %vm447, %vm447
    %vm462 = vmpackc.even %vm461, %vm461
    %vm463 = vmpackc.low %vm448, %vm448
    %vm464 = vmpackc.even %vm463, %vm463
    %v465 = vsel %vm450, 16843009, 0
    %v466 = vsel %vm452, 16843009, 0
    %v467 = vsel %vm454, 16843009, 0
    %v468 = vsel %vm456, 16843009, 0
    %v469 = vsel %vm458, 16843009, 0
    %v470 = vsel %vm460, 16843009, 0
    %v471 = vsel %vm462, 16843009, 0
    %v472 = vsel %vm464, 16843009, 0
    %s473 = scalar_lea.vmem [#allocation5], 8
    %474 = vst.msk [vmem:[%s473] sm:$0x1] %vm312, %v465
    %475 = vst.msk [vmem:[%s473 + $0x1] sm:$0x1] %vm312, %v466
    %476 = vst.msk [vmem:[%s473 + $0x2] sm:$0x1] %vm312, %v467
    %477 = vst.msk [vmem:[%s473 + $0x3] sm:$0x1] %vm312, %v468
    %478 = vst.msk [vmem:[%s473 + $0x4] sm:$0x1] %vm312, %v469
    %479 = vst.msk [vmem:[%s473 + $0x5] sm:$0x1] %vm312, %v470
    %480 = vst.msk [vmem:[%s473 + $0x6] sm:$0x1] %vm312, %v471
    %481 = vst.msk [vmem:[%s473 + $0x7] sm:$0x1] %vm312, %v472
    %v482 = vsel %vm155, %v150, -inf
    %v483 = vrot.slane %v482, 4
    %v484 = vmax.f32 %v482, %v483
    %v485 = vrot.slane %v484, 2
    %v486 = vmax.f32 %v484, %v485
    %v487 = vrot.slane %v486, 1
    %v488 = vmax.f32 %v486, %v487
    %v489 = vsub.f32 %v150, %v488
    %v490 = vmul.f32 %v489, 1.442695
    %v491 = vpow.pop %v490
    %v492 = vsel %vm155, %v491, 0.0
    %v493 = vrot.slane %v492, 4
    %v494 = vadd.f32 %v492, %v493
    %v495 = vrot.slane %v494, 2
    %v496 = vadd.f32 %v494, %v495
    %v497 = vrot.slane %v496, 1
    %v498 = vadd.f32 %v496, %v497
    %v499 = vrcp.pop %v498
    %v500 = vmul.f32 %v491, %v499
    %v501 = vsel %vm155, %v500, -inf
    %v502 = vrot.slane %v501, 4
    %v503 = vmax.f32 %v501, %v502
    %v504 = vrot.slane %v503, 2
    %v505 = vmax.f32 %v503, %v504
    %v506 = vrot.slane %v505, 1
    %v507 = vmax.f32 %v505, %v506
    %vm508 = vcmp.ge.f32.partialorder %v500, %v507
    %v509 = vsel %vm508, %v154, 8
    %v510 = vsel %vm155, %v509, 2147483647
    %v511 = vrot.slane %v510, 4
    %vm512 = vcmp.lt.s32.totalorder %v510, %v511
    %v513 = vsel %vm512, %v510, %v511
    %v514 = vrot.slane %v513, 2
    %vm515 = vcmp.lt.s32.totalorder %v513, %v514
    %v516 = vsel %vm515, %v513, %v514
    %v517 = vrot.slane %v516, 1
    %vm518 = vcmp.lt.s32.totalorder %v516, %v517
    %v519 = vsel %vm518, %v516, %v517
    %v520 = vsel %vm194, %v507, 0.0
    %v521 = vsel %vm194, %v519, 0
    %vm522 = vcmp.eq.s32.totalorder %v154, %v519
    %v523 = vsel %vm522, -inf, %v500
    %v524 = vsel %vm155, %v523, -inf
    %v525 = vrot.slane %v524, 4
    %v526 = vmax.f32 %v524, %v525
    %v527 = vrot.slane %v526, 2
    %v528 = vmax.f32 %v526, %v527
    %v529 = vrot.slane %v528, 1
    %v530 = vmax.f32 %v528, %v529
    %vm531 = vcmp.ge.f32.partialorder %v523, %v530
    %v532 = vsel %vm531, %v154, 8
    %v533 = vsel %vm155, %v532, 2147483647
    %v534 = vrot.slane %v533, 4
    %vm535 = vcmp.lt.s32.totalorder %v533, %v534
    %v536 = vsel %vm535, %v533, %v534
    %v537 = vrot.slane %v536, 2
    %vm538 = vcmp.lt.s32.totalorder %v536, %v537
    %v539 = vsel %vm538, %v536, %v537
    %v540 = vrot.slane %v539, 1
    %vm541 = vcmp.lt.s32.totalorder %v539, %v540
    %v542 = vsel %vm541, %v539, %v540
    %v543 = vsel %vm218, %v530, %v520
    %v544 = vsel %vm218, %v542, %v521
    %vm545 = vcmp.eq.s32.totalorder %v154, %v542
    %v546 = vsel %vm545, -inf, %v523
    %v547 = vsel %vm155, %v546, -inf
    %v548 = vrot.slane %v547, 4
    %v549 = vmax.f32 %v547, %v548
    %v550 = vrot.slane %v549, 2
    %v551 = vmax.f32 %v549, %v550
    %v552 = vrot.slane %v551, 1
    %v553 = vmax.f32 %v551, %v552
    %vm554 = vcmp.ge.f32.partialorder %v546, %v553
    %v555 = vsel %vm554, %v154, 8
    %v556 = vsel %vm155, %v555, 2147483647
    %v557 = vrot.slane %v556, 4
    %vm558 = vcmp.lt.s32.totalorder %v556, %v557
    %v559 = vsel %vm558, %v556, %v557
    %v560 = vrot.slane %v559, 2
    %vm561 = vcmp.lt.s32.totalorder %v559, %v560
    %v562 = vsel %vm561, %v559, %v560
    %v563 = vrot.slane %v562, 1
    %vm564 = vcmp.lt.s32.totalorder %v562, %v563
    %v565 = vsel %vm564, %v562, %v563
    %v566 = vsel %vm242, %v553, %v543
    %v567 = vsel %vm242, %v565, %v544
    %vm568 = vcmp.eq.s32.totalorder %v154, %v565
    %v569 = vsel %vm568, -inf, %v546
    %v570 = vsel %vm155, %v569, -inf
    %v571 = vrot.slane %v570, 4
    %v572 = vmax.f32 %v570, %v571
    %v573 = vrot.slane %v572, 2
    %v574 = vmax.f32 %v572, %v573
    %v575 = vrot.slane %v574, 1
    %v576 = vmax.f32 %v574, %v575
    %vm577 = vcmp.ge.f32.partialorder %v569, %v576
    %v578 = vsel %vm577, %v154, 8
    %v579 = vsel %vm155, %v578, 2147483647
    %v580 = vrot.slane %v579, 4
    %vm581 = vcmp.lt.s32.totalorder %v579, %v580
    %v582 = vsel %vm581, %v579, %v580
    %v583 = vrot.slane %v582, 2
    %vm584 = vcmp.lt.s32.totalorder %v582, %v583
    %v585 = vsel %vm584, %v582, %v583
    %v586 = vrot.slane %v585, 1
    %vm587 = vcmp.lt.s32.totalorder %v585, %v586
    %v588 = vsel %vm587, %v585, %v586
    %v589 = vsel %vm266, %v576, %v566
    %v590 = vsel %vm266, %v588, %v567
    %v591 = vsel %vm269, %v589, 0.0
    %v592 = vrot.slane %v591, 4
    %v593 = vadd.f32 %v591, %v592
    %v594 = vrot.slane %v593, 2
    %v595 = vadd.f32 %v593, %v594
    %v596 = vrot.slane %v595, 1
    %v597 = vadd.f32 %v595, %v596
    %v598 = vrcp.pop %v597
    %v599 = vmul.f32 %v589, %v598
    %s600 = scalar_lea.vmem [#allocation6], 8
    %601 = vst.msk [vmem:[%s600] sm:$0xf] %vm269, %v599
    %vm602 = vcmp.eq.s32.totalorder %v590, 0
    %vm603 = vcmp.eq.s32.totalorder %v590, 1
    %vm604 = vcmp.eq.s32.totalorder %v590, 2
    %vm605 = vcmp.eq.s32.totalorder %v590, 3
    %vm606 = vcmp.eq.s32.totalorder %v590, 4
    %vm607 = vcmp.eq.s32.totalorder %v590, 5
    %vm608 = vcmp.eq.s32.totalorder %v590, 6
    %vm609 = vcmp.eq.s32.totalorder %v590, 7
    %vm610 = vmpackc.low %vm602, %vm602
    %vm611 = vmpackc.even %vm610, %vm610
    %vm612 = vmpackc.low %vm603, %vm603
    %vm613 = vmpackc.even %vm612, %vm612
    %vm614 = vmpackc.low %vm604, %vm604
    %vm615 = vmpackc.even %vm614, %vm614
    %vm616 = vmpackc.low %vm605, %vm605
    %vm617 = vmpackc.even %vm616, %vm616
    %vm618 = vmpackc.low %vm606, %vm606
    %vm619 = vmpackc.even %vm618, %vm618
    %vm620 = vmpackc.low %vm607, %vm607
    %vm621 = vmpackc.even %vm620, %vm620
    %vm622 = vmpackc.low %vm608, %vm608
    %vm623 = vmpackc.even %vm622, %vm622
    %vm624 = vmpackc.low %vm609, %vm609
    %vm625 = vmpackc.even %vm624, %vm624
    %v626 = vsel %vm611, 16843009, 0
    %v627 = vsel %vm613, 16843009, 0
    %v628 = vsel %vm615, 16843009, 0
    %v629 = vsel %vm617, 16843009, 0
    %v630 = vsel %vm619, 16843009, 0
    %v631 = vsel %vm621, 16843009, 0
    %v632 = vsel %vm623, 16843009, 0
    %v633 = vsel %vm625, 16843009, 0
    %s634 = scalar_lea.vmem [#allocation5], 16
    %635 = vst.msk [vmem:[%s634] sm:$0x1] %vm312, %v626
    %636 = vst.msk [vmem:[%s634 + $0x1] sm:$0x1] %vm312, %v627
    %637 = vst.msk [vmem:[%s634 + $0x2] sm:$0x1] %vm312, %v628
    %638 = vst.msk [vmem:[%s634 + $0x3] sm:$0x1] %vm312, %v629
    %639 = vst.msk [vmem:[%s634 + $0x4] sm:$0x1] %vm312, %v630
    %640 = vst.msk [vmem:[%s634 + $0x5] sm:$0x1] %vm312, %v631
    %641 = vst.msk [vmem:[%s634 + $0x6] sm:$0x1] %vm312, %v632
    %642 = vst.msk [vmem:[%s634 + $0x7] sm:$0x1] %vm312, %v633
    // Predicated region
    $region18: #{tpu_custom_call.1} parent=1 // pred_check
      _
    $region19: #{tpu_custom_call.1} parent=1 // pred_check_branch
      %644 = sbr.rel (0) target = $region21
    $region20: #{tpu_custom_call.1} parent=1 // pred_region
      %s646 = ssub.s32 384, 384
      %647 = vsyncadd [#allocation4], %s646
      %s648 = sshll.u32 [#allocation5], 4
      %s649 = int_to_ptr.vmem [resolvable:$true] %s648
      %654 = dma.vmem_to_hbm [thread:$0]  %s649, 384, %s3, [#allocation4], 16, 16, 1
    $region21: #{tpu_custom_call.1} parent=1 // pred_fallthru
      _
    // Predicated region
    $region22: #{tpu_custom_call.1} parent=1 // pred_check
      _
    $region23: #{tpu_custom_call.1} parent=1 // pred_check_branch
      %656 = sbr.rel (0) target = $region25
    $region24: #{tpu_custom_call.1} parent=1 // pred_region
      %s658 = ssub.s32 192, 192
      %659 = vsyncadd [#allocation7], %s658
      %s660 = sshll.u32 [#allocation6], 4
      %s661 = int_to_ptr.vmem [resolvable:$true] %s660
      %666 = dma.vmem_to_hbm [thread:$0]  %s661, 192, %s4, [#allocation7], 64, 64, 4
    $region25: #{tpu_custom_call.1} parent=1 // pred_fallthru
      _
    // Predicated region
    $region26: #{tpu_custom_call.1} parent=1 // pred_check
      _
    $region27: #{tpu_custom_call.1} parent=1 // pred_check_branch
      %668 = sbr.rel (0) target = $region29
    $region28: #{tpu_custom_call.1} parent=1 // pred_region
      %669 = dma.done [#allocation4], 384
    $region29: #{tpu_custom_call.1} parent=1 // pred_fallthru
      _
    // Predicated region
    $region30: #{tpu_custom_call.1} parent=1 // pred_check
      _
    $region31: #{tpu_custom_call.1} parent=1 // pred_check_branch
      %671 = sbr.rel (0) target = $region33
    $region32: #{tpu_custom_call.1} parent=1 // pred_region
      %672 = dma.done [#allocation7], 192
    $region33: #{tpu_custom_call.1} parent=1 // pred_fallthru
      _
    %673 = vsyncpa [#allocation3], 1
    %674 = vsyncpa [#allocation4], 1
    %675 = vsyncpa [#allocation7], 1

</llo_original>
